<compile_context>
chip_gen: v7x
topology: tpu7x:2x2x1
jax: 0.10.0
libtpu: 0.0.40
codegen_flags: <defaults>
</compile_context>

<pallas_src>
import functools

import jax
import jax.numpy as jnp
from jax.experimental import pallas as pl
from jax.experimental.pallas import tpu as pltpu


_SMALL_C_MAX = 8          # VPU path for C <= this, MXU path above.
_LANE = 128               # TPU lane width; spatial tile is a multiple of this.


def _round_up(x, m):
    return ((x + m - 1) // m) * m


def _conv1x1_vpu_kernel(w_ref, b_ref, x_ref, o_ref):
    """Small-C path: scalar weights from SMEM, broadcast mul/add on the VPU.

    w_ref: SMEM (C*C,) f32, row-major W[co, ci]
    b_ref: SMEM (C,)   f32
    x_ref, o_ref: VMEM (1, C, T) blocks, spatial (lane-dense) last axis.
    """
    C = x_ref.shape[1]
    # Load each channel row once as a lane-dense (1, T) slab.
    x_rows = [x_ref[0, ci:ci + 1, :].astype(jnp.float32) for ci in range(C)]
    for co in range(C):
        acc = x_rows[0] * w_ref[co * C]
        for ci in range(1, C):
            acc = acc + x_rows[ci] * w_ref[co * C + ci]
        o_ref[0, co:co + 1, :] = (acc + b_ref[co]).astype(o_ref.dtype)


def _conv1x1_mxu_kernel(w_ref, b_ref, x_ref, o_ref):
    """Large-C path: out(C, T) = W(C, C) @ x(C, T) + b on the MXU."""
    acc = jnp.dot(w_ref[...], x_ref[0], preferred_element_type=jnp.float32)
    o_ref[0] = (acc + b_ref[...]).astype(o_ref.dtype)


@functools.partial(jax.jit, static_argnames=("t_hw",))
def conv1x1_forward(x_nchw, weight, bias, *, t_hw=1024):
    """x_nchw: (B, C, H, W); weight: (C, C); bias: (C,). Returns (out, logdet)."""
    B, C, H, W = x_nchw.shape
    HW = H * W
    weight = weight.astype(jnp.float32)
    bias = bias.astype(jnp.float32)

    # Spatial tile: lane-dense (multiple of 128), as large as requested but no
    # larger than the (128-padded) spatial extent.
    hw_ceil = _round_up(HW, _LANE)
    T = max(_LANE, (min(t_hw, hw_ceil) // _LANE) * _LANE)
    # v7x has 2 TensorCores sharing HBM: prefer >= 2 parallel grid steps when
    # the problem allows it so both cores get work.
    if B == 1 and hw_ceil // T < 2 and hw_ceil >= 2 * _LANE:
        T = max(_LANE, ((hw_ceil // 2) // _LANE) * _LANE)
    HW_pad = _round_up(HW, T)

    # NCHW -> (B, C, H*W) is a free reshape (no transpose, no extra HBM pass).
    x3 = x_nchw.reshape(B, C, HW)
    if HW_pad != HW:
        x3 = jnp.pad(x3, ((0, 0), (0, 0), (0, HW_pad - HW)))

    grid = (B, HW_pad // T)
    # NOTE: the channel axis of these blocks equals the full C (only the
    # spatial axis is blocked); blocking C would hit the (8,128) constraint.
    x_spec = pl.BlockSpec((1, C, T), lambda b, s: (b, 0, s))
    out_spec = pl.BlockSpec((1, C, T), lambda b, s: (b, 0, s))

    itemsize = x3.dtype.itemsize
    cost = pl.CostEstimate(
        flops=2 * B * C * C * HW_pad,
        transcendentals=0,
        bytes_accessed=2 * B * C * HW_pad * itemsize + C * C * 4 + C * 4,
    )
    cparams = pltpu.CompilerParams(
        dimension_semantics=("parallel", "parallel"),
        # Explicit scoped-VMEM budget with headroom on every generation
        # (v5e default scoped is 16 MiB; v7x physical is 64 MiB).
        vmem_limit_bytes=32 * 1024 * 1024,
    )

    if C <= _SMALL_C_MAX:
        # Weights/bias live in SMEM as scalars; compute entirely on the VPU.
        out3 = pl.pallas_call(
            _conv1x1_vpu_kernel,
            out_shape=jax.ShapeDtypeStruct((B, C, HW_pad), x3.dtype),
            grid_spec=pltpu.PrefetchScalarGridSpec(
                num_scalar_prefetch=0,
                grid=grid,
                in_specs=[
                    pl.BlockSpec(memory_space=pltpu.MemorySpace.SMEM),  # W flat
                    pl.BlockSpec(memory_space=pltpu.MemorySpace.SMEM),  # bias
                    x_spec,
                ],
                out_specs=out_spec,
            ),
            compiler_params=cparams,
            cost_estimate=cost,
        )(weight.reshape(C * C), bias, x3)
    else:
        # MXU path: resident (C, C) weight in VMEM, bias as a (C, 1) column.
        out3 = pl.pallas_call(
            _conv1x1_mxu_kernel,
            out_shape=jax.ShapeDtypeStruct((B, C, HW_pad), x3.dtype),
            grid_spec=pltpu.PrefetchScalarGridSpec(
                num_scalar_prefetch=0,
                grid=grid,
                in_specs=[
                    pl.BlockSpec((C, C), lambda b, s: (0, 0)),
                    pl.BlockSpec((C, 1), lambda b, s: (0, 0)),
                    x_spec,
                ],
                out_specs=out_spec,
            ),
            compiler_params=cparams,
            cost_estimate=cost,
        )(weight, bias.reshape(C, 1), x3)

    out = out3[:, :, :HW].reshape(B, C, H, W)

    # logdet is a parameter-only scalar (independent of x).
    # TODO(synk): slogdet (LU) of the CxC weight has no clean single-kernel
    # Pallas equivalent and is not a hot path; computed in plain JAX.
    _, logdet = jnp.linalg.slogdet(weight)
    logdet = logdet * (H * W)
    return out, logdet


def make_params(key, channels):
    """Deterministic parameters matching Conv1x1.__init__:
    orthogonal (C, C) weight (nn.init.orthogonal_ on the 1x1 conv weight) and
    a small uniform bias (Conv2d default)."""
    kw, kb = jax.random.split(key)
    a = jax.random.normal(kw, (channels, channels), dtype=jnp.float32)
    q, r = jnp.linalg.qr(a)
    q = q * jnp.sign(jnp.diag(r))[None, :]         # orthogonal weight
    bound = 1.0 / jnp.sqrt(jnp.float32(channels))  # fan_in = C * 1 * 1
    bias = jax.random.uniform(kb, (channels,), jnp.float32, -bound, bound)
    return q, bias


if __name__ == "__main__":
    key = jax.random.PRNGKey(0)
    kx, kp, kx2 = jax.random.split(key, 3)

    # Main check: the Glow-style NCHW shape implied by the module.
    B, C, H, W = 2, 4, 16, 16
    x = jax.random.normal(kx, (B, C, H, W), dtype=jnp.float32)
    weight, bias = make_params(kp, C)

    out, logdet = conv1x1_forward(x, weight, bias)
    jax.block_until_ready((out, logdet))

    ref = jnp.einsum("bchw,oc->bohw", x, weight,
                     precision=jax.lax.Precision.HIGHEST)
    ref = ref + bias[None, :, None, None]
    ref_logdet = jnp.linalg.slogdet(weight)[1] * (H * W)
    assert out.shape == (B, C, H, W)
    assert jnp.allclose(out, ref, atol=1e-5, rtol=1e-5)
    assert jnp.allclose(logdet, ref_logdet, atol=1e-5, rtol=1e-5)

    # Secondary check: spatial size not a multiple of 128 exercises the
    # pad/slice path (replaces the old hard assert on divisibility).
    B2, C2, H2, W2 = 1, 4, 9, 9
    x2 = jax.random.normal(kx2, (B2, C2, H2, W2), dtype=jnp.float32)
    out2, logdet2 = conv1x1_forward(x2, weight, bias)
    jax.block_until_ready((out2, logdet2))
    ref2 = jnp.einsum("bchw,oc->bohw", x2, weight,
                      precision=jax.lax.Precision.HIGHEST)
    ref2 = ref2 + bias[None, :, None, None]
    assert out2.shape == (B2, C2, H2, W2)
    assert jnp.allclose(out2, ref2, atol=1e-5, rtol=1e-5)

    print("KERNEL_OK")
</pallas_src>

<mosaic_0001>
module attributes {stable_mosaic.version = 11 : i64} {
  func.func @_conv1x1_vpu_kernel(%arg0: i32, %arg1: i32, %arg2: memref<16xf32, #tpu.memory_space<smem>>, %arg3: memref<4xf32, #tpu.memory_space<smem>>, %arg4: memref<1x4x256xf32, #tpu.memory_space<vmem>>, %arg5: memref<1x4x256xf32, #tpu.memory_space<vmem>>) attributes {dimension_semantics = [#tpu.dimension_semantics<parallel>, #tpu.dimension_semantics<parallel>], iteration_bounds = array<i64: 2, 1>, scalar_prefetch = 0 : i64, scratch_operands = 0 : i64, tpu.core_type = #tpu.core_type<tc>, window_params = [{transform_indices = @transform_0, window_bounds = array<i64: 16>}, {transform_indices = @transform_1, window_bounds = array<i64: 4>}, {transform_indices = @transform_2, window_bounds = array<i64: 1, 4, 256>}, {transform_indices = @transform_3, window_bounds = array<i64: 1, 4, 256>}]} {
    %c0 = arith.constant 0 : index
    %c0_0 = arith.constant 0 : index
    %c0_1 = arith.constant 0 : index
    %0 = vector.load %arg4[%c0, %c0_0, %c0_1] : memref<1x4x256xf32, #tpu.memory_space<vmem>>, vector<1x1x256xf32>
    %1 = vector.shape_cast %0 : vector<1x1x256xf32> to vector<1x256xf32>
    %c0_2 = arith.constant 0 : index
    %c1 = arith.constant 1 : index
    %c0_3 = arith.constant 0 : index
    %2 = vector.load %arg4[%c0_2, %c1, %c0_3] : memref<1x4x256xf32, #tpu.memory_space<vmem>>, vector<1x1x256xf32>
    %3 = vector.shape_cast %2 : vector<1x1x256xf32> to vector<1x256xf32>
    %c0_4 = arith.constant 0 : index
    %c2 = arith.constant 2 : index
    %c0_5 = arith.constant 0 : index
    %4 = vector.load %arg4[%c0_4, %c2, %c0_5] : memref<1x4x256xf32, #tpu.memory_space<vmem>>, vector<1x1x256xf32>
    %5 = vector.shape_cast %4 : vector<1x1x256xf32> to vector<1x256xf32>
    %c0_6 = arith.constant 0 : index
    %c3 = arith.constant 3 : index
    %c0_7 = arith.constant 0 : index
    %6 = vector.load %arg4[%c0_6, %c3, %c0_7] : memref<1x4x256xf32, #tpu.memory_space<vmem>>, vector<1x1x256xf32>
    %7 = vector.shape_cast %6 : vector<1x1x256xf32> to vector<1x256xf32>
    %c0_8 = arith.constant 0 : index
    %8 = memref.load %arg2[%c0_8] : memref<16xf32, #tpu.memory_space<smem>>
    %9 = vector.broadcast %8 : f32 to vector<1x256xf32>
    %10 = arith.mulf %1, %9 : vector<1x256xf32>
    %c1_9 = arith.constant 1 : index
    %11 = memref.load %arg2[%c1_9] : memref<16xf32, #tpu.memory_space<smem>>
    %12 = vector.broadcast %11 : f32 to vector<1x256xf32>
    %13 = arith.mulf %3, %12 : vector<1x256xf32>
    %14 = arith.addf %10, %13 : vector<1x256xf32>
    %c2_10 = arith.constant 2 : index
    %15 = memref.load %arg2[%c2_10] : memref<16xf32, #tpu.memory_space<smem>>
    %16 = vector.broadcast %15 : f32 to vector<1x256xf32>
    %17 = arith.mulf %5, %16 : vector<1x256xf32>
    %18 = arith.addf %14, %17 : vector<1x256xf32>
    %c3_11 = arith.constant 3 : index
    %19 = memref.load %arg2[%c3_11] : memref<16xf32, #tpu.memory_space<smem>>
    %20 = vector.broadcast %19 : f32 to vector<1x256xf32>
    %21 = arith.mulf %7, %20 : vector<1x256xf32>
    %22 = arith.addf %18, %21 : vector<1x256xf32>
    %c0_12 = arith.constant 0 : index
    %23 = memref.load %arg3[%c0_12] : memref<4xf32, #tpu.memory_space<smem>>
    %24 = vector.broadcast %23 : f32 to vector<1x256xf32>
    %25 = arith.addf %22, %24 : vector<1x256xf32>
    %c0_13 = arith.constant 0 : index
    %c0_14 = arith.constant 0 : index
    %c0_15 = arith.constant 0 : index
    %26 = vector.load %arg5[%c0_13, %c0_14, %c0_15] : memref<1x4x256xf32, #tpu.memory_space<vmem>>, vector<1x1x256xf32>
    %27 = vector.shape_cast %26 : vector<1x1x256xf32> to vector<1x256xf32>
    %28 = vector.shape_cast %25 : vector<1x256xf32> to vector<1x1x256xf32>
    tpu.vector_store %arg5[%c0_13, %c0_14, %c0_15], %28 {strides = array<i32>} : memref<1x4x256xf32, #tpu.memory_space<vmem>>, vector<1x1x256xf32>,
    %c4 = arith.constant 4 : index
    %29 = memref.load %arg2[%c4] : memref<16xf32, #tpu.memory_space<smem>>
    %30 = vector.broadcast %29 : f32 to vector<1x256xf32>
    %31 = arith.mulf %1, %30 : vector<1x256xf32>
    %c5 = arith.constant 5 : index
    %32 = memref.load %arg2[%c5] : memref<16xf32, #tpu.memory_space<smem>>
    %33 = vector.broadcast %32 : f32 to vector<1x256xf32>
    %34 = arith.mulf %3, %33 : vector<1x256xf32>
    %35 = arith.addf %31, %34 : vector<1x256xf32>
    %c6 = arith.constant 6 : index
    %36 = memref.load %arg2[%c6] : memref<16xf32, #tpu.memory_space<smem>>
    %37 = vector.broadcast %36 : f32 to vector<1x256xf32>
    %38 = arith.mulf %5, %37 : vector<1x256xf32>
    %39 = arith.addf %35, %38 : vector<1x256xf32>
    %c7 = arith.constant 7 : index
    %40 = memref.load %arg2[%c7] : memref<16xf32, #tpu.memory_space<smem>>
    %41 = vector.broadcast %40 : f32 to vector<1x256xf32>
    %42 = arith.mulf %7, %41 : vector<1x256xf32>
    %43 = arith.addf %39, %42 : vector<1x256xf32>
    %c1_16 = arith.constant 1 : index
    %44 = memref.load %arg3[%c1_16] : memref<4xf32, #tpu.memory_space<smem>>
    %45 = vector.broadcast %44 : f32 to vector<1x256xf32>
    %46 = arith.addf %43, %45 : vector<1x256xf32>
    %c0_17 = arith.constant 0 : index
    %c1_18 = arith.constant 1 : index
    %c0_19 = arith.constant 0 : index
    %47 = vector.load %arg5[%c0_17, %c1_18, %c0_19] : memref<1x4x256xf32, #tpu.memory_space<vmem>>, vector<1x1x256xf32>
    %48 = vector.shape_cast %47 : vector<1x1x256xf32> to vector<1x256xf32>
    %49 = vector.shape_cast %46 : vector<1x256xf32> to vector<1x1x256xf32>
    tpu.vector_store %arg5[%c0_17, %c1_18, %c0_19], %49 {strides = array<i32>} : memref<1x4x256xf32, #tpu.memory_space<vmem>>, vector<1x1x256xf32>,
    %c8 = arith.constant 8 : index
    %50 = memref.load %arg2[%c8] : memref<16xf32, #tpu.memory_space<smem>>
    %51 = vector.broadcast %50 : f32 to vector<1x256xf32>
    %52 = arith.mulf %1, %51 : vector<1x256xf32>
    %c9 = arith.constant 9 : index
    %53 = memref.load %arg2[%c9] : memref<16xf32, #tpu.memory_space<smem>>
    %54 = vector.broadcast %53 : f32 to vector<1x256xf32>
    %55 = arith.mulf %3, %54 : vector<1x256xf32>
    %56 = arith.addf %52, %55 : vector<1x256xf32>
    %c10 = arith.constant 10 : index
    %57 = memref.load %arg2[%c10] : memref<16xf32, #tpu.memory_space<smem>>
    %58 = vector.broadcast %57 : f32 to vector<1x256xf32>
    %59 = arith.mulf %5, %58 : vector<1x256xf32>
    %60 = arith.addf %56, %59 : vector<1x256xf32>
    %c11 = arith.constant 11 : index
    %61 = memref.load %arg2[%c11] : memref<16xf32, #tpu.memory_space<smem>>
    %62 = vector.broadcast %61 : f32 to vector<1x256xf32>
    %63 = arith.mulf %7, %62 : vector<1x256xf32>
    %64 = arith.addf %60, %63 : vector<1x256xf32>
    %c2_20 = arith.constant 2 : index
    %65 = memref.load %arg3[%c2_20] : memref<4xf32, #tpu.memory_space<smem>>
    %66 = vector.broadcast %65 : f32 to vector<1x256xf32>
    %67 = arith.addf %64, %66 : vector<1x256xf32>
    %c0_21 = arith.constant 0 : index
    %c2_22 = arith.constant 2 : index
    %c0_23 = arith.constant 0 : index
    %68 = vector.load %arg5[%c0_21, %c2_22, %c0_23] : memref<1x4x256xf32, #tpu.memory_space<vmem>>, vector<1x1x256xf32>
    %69 = vector.shape_cast %68 : vector<1x1x256xf32> to vector<1x256xf32>
    %70 = vector.shape_cast %67 : vector<1x256xf32> to vector<1x1x256xf32>
    tpu.vector_store %arg5[%c0_21, %c2_22, %c0_23], %70 {strides = array<i32>} : memref<1x4x256xf32, #tpu.memory_space<vmem>>, vector<1x1x256xf32>,
    %c12 = arith.constant 12 : index
    %71 = memref.load %arg2[%c12] : memref<16xf32, #tpu.memory_space<smem>>
    %72 = vector.broadcast %71 : f32 to vector<1x256xf32>
    %73 = arith.mulf %1, %72 : vector<1x256xf32>
    %c13 = arith.constant 13 : index
    %74 = memref.load %arg2[%c13] : memref<16xf32, #tpu.memory_space<smem>>
    %75 = vector.broadcast %74 : f32 to vector<1x256xf32>
    %76 = arith.mulf %3, %75 : vector<1x256xf32>
    %77 = arith.addf %73, %76 : vector<1x256xf32>
    %c14 = arith.constant 14 : index
    %78 = memref.load %arg2[%c14] : memref<16xf32, #tpu.memory_space<smem>>
    %79 = vector.broadcast %78 : f32 to vector<1x256xf32>
    %80 = arith.mulf %5, %79 : vector<1x256xf32>
    %81 = arith.addf %77, %80 : vector<1x256xf32>
    %c15 = arith.constant 15 : index
    %82 = memref.load %arg2[%c15] : memref<16xf32, #tpu.memory_space<smem>>
    %83 = vector.broadcast %82 : f32 to vector<1x256xf32>
    %84 = arith.mulf %7, %83 : vector<1x256xf32>
    %85 = arith.addf %81, %84 : vector<1x256xf32>
    %c3_24 = arith.constant 3 : index
    %86 = memref.load %arg3[%c3_24] : memref<4xf32, #tpu.memory_space<smem>>
    %87 = vector.broadcast %86 : f32 to vector<1x256xf32>
    %88 = arith.addf %85, %87 : vector<1x256xf32>
    %c0_25 = arith.constant 0 : index
    %c3_26 = arith.constant 3 : index
    %c0_27 = arith.constant 0 : index
    %89 = vector.load %arg5[%c0_25, %c3_26, %c0_27] : memref<1x4x256xf32, #tpu.memory_space<vmem>>, vector<1x1x256xf32>
    %90 = vector.shape_cast %89 : vector<1x1x256xf32> to vector<1x256xf32>
    %91 = vector.shape_cast %88 : vector<1x256xf32> to vector<1x1x256xf32>
    tpu.vector_store %arg5[%c0_25, %c3_26, %c0_27], %91 {strides = array<i32>} : memref<1x4x256xf32, #tpu.memory_space<vmem>>, vector<1x1x256xf32>,
    return
  }
  func.func @transform_0(%arg0: i32, %arg1: i32) -> i32 {
    %c0_i32 = arith.constant 0 : i32
    %c0_i32_0 = arith.constant 0 : i32
    return %c0_i32 : i32
  }
  func.func @transform_1(%arg0: i32, %arg1: i32) -> i32 {
    %c0_i32 = arith.constant 0 : i32
    %c0_i32_0 = arith.constant 0 : i32
    return %c0_i32 : i32
  }
  func.func @transform_2(%arg0: i32, %arg1: i32) -> (i32, i32, i32) {
    %c0_i32 = arith.constant 0 : i32
    %c0_i32_0 = arith.constant 0 : i32
    return %arg0, %c0_i32, %arg1 : i32, i32, i32
  }
  func.func @transform_3(%arg0: i32, %arg1: i32) -> (i32, i32, i32) {
    %c0_i32 = arith.constant 0 : i32
    %c0_i32_0 = arith.constant 0 : i32
    return %arg0, %c0_i32, %arg1 : i32, i32, i32
  }
}

</mosaic_0001>

<llo_original>
// kernel: custom-call.2
$region0: #{custom-call.2}
  %s0 = inlined_call_operand.vmem [shape: f32[4,4], index: 0, kind: input, shape index: {}]
  %s1 = inlined_call_operand.vmem [shape: f32[4,4], index: 1, kind: output, shape index: {0}]
  %s2 = inlined_call_operand.hbm [shape: s32[4], index: 2, kind: output, shape index: {1}]
  %s3 = inlined_call_operand.hbm [shape: s32[4], index: 3, kind: output, shape index: {2}]
  %4 = xla_tuple %s1, %s2, %s3
  $region1: #{custom-call.2} parent=0
    #allocation0 [shape = 'u8[4096]{0}', space=vmem, size = 0x1000, scoped, tag = 'operand span for operand 0']
    #allocation1 [shape = 'u8[2048]{0}', space=vmem, size = 0x800, scoped, tag = 'packed  for operand 0']
    #allocation2 [shape = 'u8[4096]{0}', space=vmem, size = 0x1000, scoped, tag = 'operand span for operand 1']
    #allocation3 [shape = 'u8[2048]{0}', space=vmem, size = 0x800, scoped, tag = 'packed  for operand 1']
    #allocation4 [shape = 'u8[4096]{0}', space=vmem, size = 0x1000, scoped, tag = 'operand span for operand 2']
    #allocation5 [shape = 'u8[512]{0}', space=vmem, size = 0x400, scoped, tag = 'packed  for operand 2']
    #allocation6 [shape = 's32[1]{0}', space=sflag, size = 0x4, scoped, tag = 'scoped memory for custom-call.2']
    #allocation7 [shape = 'u8[4096]{0}', space=vmem, size = 0x1000, scoped, tag = 'operand span for operand 3']
    #allocation8 [shape = 'u8[512]{0}', space=vmem, size = 0x400, scoped, tag = 'packed  for operand 3']
    #allocation9 [shape = 's32[1]{0}', space=sflag, size = 0x4, scoped, tag = 'scoped memory for custom-call.2']
    #allocation10 [shape = 's32[4,128]{1,0}', space=vmem, size = 0x1000, scoped, tag = 'scratch for permutations']
    %5 = vsyncpa [#allocation6], 0
    %6 = vsyncpa [#allocation9], 0
    %p8 = scmp.gt.s32.totalorder 4, 0
    // Predicated region
    $region2: #{custom-call.2} parent=1 // pred_check
      %p9 = pneg %p8
    $region3: #{custom-call.2} parent=1 // pred_check_branch
      %11 = sbr.rel (%p9) target = $region5
    $region4: #{custom-call.2} parent=1 // pred_region
      %s12 = sshra.s32 4, 3
      %p13 = scmp.gt.s32.totalorder %s12, 0
      // Predicated region
      $region6: #{custom-call.2} parent=4 // pred_check
        %p14 = pneg %p13
      $region7: #{custom-call.2} parent=4 // pred_check_branch
        %16 = sbr.rel (%p14) target = $region9
      $region8: #{custom-call.2} parent=4 // pred_region
        %s17 = ssub.s32 %s12, 1
        %s18 = smul.u32 %s17, 128
        %s19 = sshra.s32 %s18, 4
        %s20 = scalar_lea.vmem %s0, %s19
        %v21 = vld [vmem:[%s0] sm:$0xff]
        // While loop
        $region10: #{custom-call.2} parent=8 // loop_pre_header
          _
        $region11: #{custom-call.2} parent=8 // loop_header
          %s22 = sphi %s0, %s44
          %s23 = sphi [#allocation1], %s45
          %v24 = vphi %v21, %v46
          %s25 = ssub.s32 %s20, 64
          %p26 = scmp.gt.s32.totalorder %s22, %s25
        $region12: #{custom-call.2} parent=8 // loop_header_branch
          %28 = sbr.rel (%p26) target = $region16
        $region13: #{custom-call.2} parent=8 // loop_body
          %29 = vst [vmem:[%s23] sm:$0xff] %v24
          %v30 = vld [vmem:[%s22 + $0x8] sm:$0xff]
          %31 = vst [vmem:[%s23 + $0x8] sm:$0xff] %v30
          %v32 = vld [vmem:[%s22 + $0x10] sm:$0xff]
          %33 = vst [vmem:[%s23 + $0x10] sm:$0xff] %v32
          %v34 = vld [vmem:[%s22 + $0x18] sm:$0xff]
          %35 = vst [vmem:[%s23 + $0x18] sm:$0xff] %v34
          %v36 = vld [vmem:[%s22 + $0x20] sm:$0xff]
          %37 = vst [vmem:[%s23 + $0x20] sm:$0xff] %v36
          %v38 = vld [vmem:[%s22 + $0x28] sm:$0xff]
          %39 = vst [vmem:[%s23 + $0x28] sm:$0xff] %v38
          %v40 = vld [vmem:[%s22 + $0x30] sm:$0xff]
          %41 = vst [vmem:[%s23 + $0x30] sm:$0xff] %v40
          %v42 = vld [vmem:[%s22 + $0x38] sm:$0xff]
          %43 = vst [vmem:[%s23 + $0x38] sm:$0xff] %v42
        $region14: #{custom-call.2} parent=8 // loop_footer
          %s44 = scalar_lea.vmem %s22, 64
          %s45 = scalar_lea.vmem %s23, 64
          %v46 = vld [vmem:[%s22 + $0x40] sm:$0xff]
        $region15: #{custom-call.2} parent=8 // loop_footer_branch
          %47 = sbr.rel target = $region11
        $region16: #{custom-call.2} parent=8 // loop_exit
          _
        // While loop
        $region17: #{custom-call.2} parent=8 // loop_pre_header
          _
        $region18: #{custom-call.2} parent=8 // loop_header
          %s48 = sphi %s22, %s56
          %s49 = sphi %s23, %s57
          %v50 = vphi %v24, %v50
          %p51 = scmp.gt.s32.totalorder %s48, %s20
        $region19: #{custom-call.2} parent=8 // loop_header_branch
          %53 = sbr.rel (%p51) target = $region23
        $region20: #{custom-call.2} parent=8 // loop_body
          %v54 = vld [vmem:[%s48] sm:$0xff]
          %55 = vst [vmem:[%s49] sm:$0xff] %v54
        $region21: #{custom-call.2} parent=8 // loop_footer
          %s56 = scalar_lea.vmem %s48, 8
          %s57 = scalar_lea.vmem %s49, 8
        $region22: #{custom-call.2} parent=8 // loop_footer_branch
          %58 = sbr.rel target = $region18
        $region23: #{custom-call.2} parent=8 // loop_exit
          _
      $region9: #{custom-call.2} parent=4 // pred_fallthru
        _
      %s59 = sand.u32 4, 7
      %s60 = sshllo.u32 0, %s59
      %s61 = smul.u32 %s12, 128
      %s62 = sshra.s32 %s61, 4
      %s63 = scalar_lea.vmem [#allocation1], %s62
      %s64 = smul.u32 %s12, 128
      %s65 = sshra.s32 %s64, 4
      %s66 = scalar_lea.vmem %s0, %s65
      %v67 = vld [vmem:[%s66] sm:%s60]
      %68 = vst [vmem:[%s63] sm:%s60] %v67
    $region5: #{custom-call.2} parent=1 // pred_fallthru
      _
    %s70 = sshllo.u32 0, 4
    %v71 = vld [vmem:[#allocation1] sm:%s70]
    %72 = vst [vmem:[#allocation0] sm:%s70] %v71
    %v73 = vld [vmem:[#allocation0] sm:$0xff]
    %74 = vst [vmem:[#allocation2] sm:$0xff] %v73
    %75 = vst [vmem:[#allocation4] sm:$0x1] 0
    %v76 = vlaneseq
    %v77 = vshrl.u32 %v76, 7
    %v78 = vmov %v77
    %80 = vst [vmem:[#allocation10] sm:$0xff] %v78
    loop: start=0, step=1, limit=4
    $region25: #{custom-call.2} parent=1 // loop_pre_header
      _
    $region26: #{custom-call.2} parent=1 // loop_header
      %s82 = sphi 0, %s86
      %p83 = scmp.ge.s32.totalorder %s82, 4
    $region27: #{custom-call.2} parent=1 // loop_header_branch
      %85 = sbr.rel (%p83) target = $region31
    $region28: #{custom-call.2} parent=1 // loop_body
      %v87 = vstv %s82
      %v88 = vlaneseq
      %v89 = vshrl.u32 %v88, 7
      %v90 = vmov %v89
      %v91 = vld [vmem:[#allocation2] sm:$0xff]
      %v92 = vand.u32 2147483647, %v91
      %v94 = vstv %s82
      %vm95 = vcmp.ge.s32.totalorder %v90, %v94
      %vm96 = vcmp.lt.s32.totalorder %v90, 4
      %vm97 = vmand %vm95, %vm96
      %vm98 = vcmp.lt.f32.partialorder -inf, %v92
      %vm99 = vmand %vm97, %vm98
      %v100 = vsel %vm99, %v90, %v87
      %v101 = vsel %vm99, %v92, -inf
      %v102 = vrot.slane %v101, 1
      %v103 = vrot.slane %v100, 1
      %vm104 = vcmp.ge.f32.partialorder %v102, %v101
      %v105 = vsel %vm104, %v102, %v101
      %v106 = vsel %vm104, %v103, %v100
      %v107 = vrot.slane %v102, 1
      %v108 = vrot.slane %v103, 1
      %vm109 = vcmp.ge.f32.partialorder %v107, %v105
      %v110 = vsel %vm109, %v107, %v105
      %v111 = vsel %vm109, %v108, %v106
      %v112 = vrot.slane %v107, 1
      %v113 = vrot.slane %v108, 1
      %vm114 = vcmp.ge.f32.partialorder %v112, %v110
      %v115 = vsel %vm114, %v112, %v110
      %v116 = vsel %vm114, %v113, %v111
      %v117 = vrot.slane %v112, 1
      %v118 = vrot.slane %v113, 1
      %vm119 = vcmp.ge.f32.partialorder %v117, %v115
      %v120 = vsel %vm119, %v117, %v115
      %v121 = vsel %vm119, %v118, %v116
      %v122 = vrot.slane %v117, 1
      %v123 = vrot.slane %v118, 1
      %vm124 = vcmp.ge.f32.partialorder %v122, %v120
      %v125 = vsel %vm124, %v122, %v120
      %v126 = vsel %vm124, %v123, %v121
      %v127 = vrot.slane %v122, 1
      %v128 = vrot.slane %v123, 1
      %vm129 = vcmp.ge.f32.partialorder %v127, %v125
      %v130 = vsel %vm129, %v127, %v125
      %v131 = vsel %vm129, %v128, %v126
      %v132 = vrot.slane %v127, 1
      %v133 = vrot.slane %v128, 1
      %vm134 = vcmp.ge.f32.partialorder %v132, %v130
      %v135 = vsel %vm134, %v132, %v130
      %v136 = vsel %vm134, %v133, %v131
      %s137 = ssub.s32 128, %s82
      %138 = vrot.lane.b32.xlu0 %v136, %s137
      %v139 = vpop.permute.xlu0 %138
      %s140 = vtos %v139
      %v141 = vstv %s82
      %v142 = vlaneseq
      %v143 = vand.u32 %v142, 127
      %vm144 = vcmp.eq.s32.totalorder %v143, %v141
      %v145 = vstv %s140
      %v146 = vld [vmem:[#allocation4] ss:$0 sm:$0xff]
      %v147 = vsel %vm144, %v145, %v146
      %148 = vst [vmem:[#allocation4] sm:$0x1] %v147
      %s149 = scalar_lea.vmem [#allocation2], %s82
      %s150 = scalar_lea.vmem [#allocation2], %s140
      %v151 = vld [vmem:[%s149] ss:$0 sm:$0xff]
      %v152 = vld [vmem:[%s150] ss:$0 sm:$0xff]
      %153 = vst [vmem:[%s150] sm:$0x1] %v151
      %154 = vst [vmem:[%s149] sm:$0x1] %v152
      %s155 = scalar_lea.vmem [#allocation10], %s82
      %s156 = scalar_lea.vmem [#allocation10], %s140
      %v157 = vld [vmem:[%s155] ss:$0 sm:$0xff]
      %v158 = vld [vmem:[%s156] ss:$0 sm:$0xff]
      %159 = vst [vmem:[%s156] sm:$0x1] %v157
      %160 = vst [vmem:[%s155] sm:$0x1] %v158
      %vm161 = vcmp.ne.f32.partialorder %v152, 0.0
      %vm162 = vmand %vm144, %vm161
      %v163 = vsel %vm162, %v152, 1.0
      %v164 = vlaneseq
      %v165 = vand.u32 %v164, 127
      %v166 = vstv %s82
      %vm167 = vcmp.gt.s32.totalorder %v165, %v166
      %v168 = vsel %vm167, %v152, 0.0
      %v169 = vlaneseq
      %v170 = vshrl.u32 %v169, 7
      %v171 = vmov %v170
      %v172 = vld [vmem:[#allocation2] sm:$0xff]
      %v174 = vstv %s82
      %vm175 = vcmp.gt.s32.totalorder %v171, %v174
      %v176 = vsel %vm175, %v163, 1.0
      %v177 = vrcp.pop %v176
      %v178 = vmul.f32 %v172, %v177
      %vm179 = vmand %vm175, %vm144
      %v180 = vsel %vm179, %v178, 0.0
      %181 = vadd.xlane.f32.xlu0 %v180
      %v182 = vpop.xlane.xlu0 %181
      %v183 = vmul.f32 %v182, %v168
      %v184 = vsub.f32 %v178, %v183
      %185 = vst [vmem:[#allocation2] sm:$0xff] %v184
    $region29: #{custom-call.2} parent=1 // loop_footer
      %s86 = sadd.s32 1, %s82
    $region30: #{custom-call.2} parent=1 // loop_footer_branch
      %81 = sbr.rel target = $region26
    $region31: #{custom-call.2} parent=1 // loop_exit
      _
    %v186 = vld [vmem:[#allocation10] sm:$0xff]
    %s187 = scalar_lea.vmem [#allocation10], 8
    %s188 = scalar_lea.vmem [#allocation10], 16
    %s189 = scalar_lea.vmem [#allocation10], 24
    %s190 = scalar_lea.vmem [#allocation10], 32
    %s191 = scalar_lea.vmem [#allocation10], 40
    %s192 = scalar_lea.vmem [#allocation10], 48
    %s193 = scalar_lea.vmem [#allocation10], 56
    %s194 = scalar_lea.vmem [#allocation10], 64
    %s195 = scalar_lea.vmem [#allocation10], 72
    %s196 = scalar_lea.vmem [#allocation10], 80
    %s197 = scalar_lea.vmem [#allocation10], 88
    %s198 = scalar_lea.vmem [#allocation10], 96
    %s199 = scalar_lea.vmem [#allocation10], 104
    %s200 = scalar_lea.vmem [#allocation10], 112
    %s201 = scalar_lea.vmem [#allocation10], 120
    %202 = vxpose.xlu0.b32.start [1/16] %v186, 128
    %203 = vxpose.xlu0.b32.cont [2/16] 0, 128
    %204 = vxpose.xlu0.b32.cont [3/16] 0, 128
    %205 = vxpose.xlu0.b32.cont [4/16] 0, 128
    %206 = vxpose.xlu0.b32.cont [5/16] 0, 128
    %207 = vxpose.xlu0.b32.cont [6/16] 0, 128
    %208 = vxpose.xlu0.b32.cont [7/16] 0, 128
    %209 = vxpose.xlu0.b32.cont [8/16] 0, 128
    %210 = vxpose.xlu0.b32.cont [9/16] 0, 128
    %211 = vxpose.xlu0.b32.cont [10/16] 0, 128
    %212 = vxpose.xlu0.b32.cont [11/16] 0, 128
    %213 = vxpose.xlu0.b32.cont [12/16] 0, 128
    %214 = vxpose.xlu0.b32.cont [13/16] 0, 128
    %215 = vxpose.xlu0.b32.cont [14/16] 0, 128
    %216 = vxpose.xlu0.b32.cont [15/16] 0, 128
    %217 = vxpose.xlu0.b32.end [16/16] 0, 128
    %v218 = vpop.trf.xlu0
    %v219 = vpop.trf.xlu0
    %v220 = vpop.trf.xlu0
    %v221 = vpop.trf.xlu0
    %v222 = vpop.trf.xlu0
    %v223 = vpop.trf.xlu0
    %v224 = vpop.trf.xlu0
    %v225 = vpop.trf.xlu0
    %v226 = vpop.trf.xlu0
    %v227 = vpop.trf.xlu0
    %v228 = vpop.trf.xlu0
    %v229 = vpop.trf.xlu0
    %v230 = vpop.trf.xlu0
    %v231 = vpop.trf.xlu0
    %v232 = vpop.trf.xlu0
    %v233 = vpop.trf.xlu0
    %234 = vst [vmem:[#allocation7] sm:$0x1] %v218
    %s236 = sshllo.u32 0, 4
    %v238 = vld [vmem:[#allocation2] sm:%s236]
    %s239 = sshllo.u32 0, 4
    %240 = vst [vmem:[#allocation3] sm:%s239] %v238
    %s242 = sshllo.u32 0, 1
    %v244 = vld [vmem:[#allocation4] sm:%s242]
    %s245 = sshllo.u32 0, 1
    %246 = vst [vmem:[#allocation5] sm:%s245] %v244
    %s248 = sshllo.u32 0, 1
    %v250 = vld [vmem:[#allocation7] sm:%s248]
    %s251 = sshllo.u32 0, 1
    %252 = vst [vmem:[#allocation8] sm:%s251] %v250
    %p254 = scmp.gt.s32.totalorder 4, 0
    // Predicated region
    $region32: #{custom-call.2} parent=1 // pred_check
      %p255 = pneg %p254
    $region33: #{custom-call.2} parent=1 // pred_check_branch
      %257 = sbr.rel (%p255) target = $region35
    $region34: #{custom-call.2} parent=1 // pred_region
      %s258 = sshra.s32 4, 3
      %p259 = scmp.gt.s32.totalorder %s258, 0
      // Predicated region
      $region36: #{custom-call.2} parent=34 // pred_check
        %p260 = pneg %p259
      $region37: #{custom-call.2} parent=34 // pred_check_branch
        %262 = sbr.rel (%p260) target = $region39
      $region38: #{custom-call.2} parent=34 // pred_region
        %s263 = ssub.s32 %s258, 1
        %s264 = smul.u32 %s263, 128
        %s265 = sshra.s32 %s264, 4
        %s266 = scalar_lea.vmem [#allocation3], %s265
        %v267 = vld [vmem:[#allocation3] sm:$0xff]
        // While loop
        $region40: #{custom-call.2} parent=38 // loop_pre_header
          _
        $region41: #{custom-call.2} parent=38 // loop_header
          %s268 = sphi [#allocation3], %s290
          %s269 = sphi %s1, %s291
          %v270 = vphi %v267, %v292
          %s271 = ssub.s32 %s266, 64
          %p272 = scmp.gt.s32.totalorder %s268, %s271
        $region42: #{custom-call.2} parent=38 // loop_header_branch
          %274 = sbr.rel (%p272) target = $region46
        $region43: #{custom-call.2} parent=38 // loop_body
          %275 = vst [vmem:[%s269] sm:$0xff] %v270
          %v276 = vld [vmem:[%s268 + $0x8] sm:$0xff]
          %277 = vst [vmem:[%s269 + $0x8] sm:$0xff] %v276
          %v278 = vld [vmem:[%s268 + $0x10] sm:$0xff]
          %279 = vst [vmem:[%s269 + $0x10] sm:$0xff] %v278
          %v280 = vld [vmem:[%s268 + $0x18] sm:$0xff]
          %281 = vst [vmem:[%s269 + $0x18] sm:$0xff] %v280
          %v282 = vld [vmem:[%s268 + $0x20] sm:$0xff]
          %283 = vst [vmem:[%s269 + $0x20] sm:$0xff] %v282
          %v284 = vld [vmem:[%s268 + $0x28] sm:$0xff]
          %285 = vst [vmem:[%s269 + $0x28] sm:$0xff] %v284
          %v286 = vld [vmem:[%s268 + $0x30] sm:$0xff]
          %287 = vst [vmem:[%s269 + $0x30] sm:$0xff] %v286
          %v288 = vld [vmem:[%s268 + $0x38] sm:$0xff]
          %289 = vst [vmem:[%s269 + $0x38] sm:$0xff] %v288
        $region44: #{custom-call.2} parent=38 // loop_footer
          %s290 = scalar_lea.vmem %s268, 64
          %s291 = scalar_lea.vmem %s269, 64
          %v292 = vld [vmem:[%s268 + $0x40] sm:$0xff]
        $region45: #{custom-call.2} parent=38 // loop_footer_branch
          %293 = sbr.rel target = $region41
        $region46: #{custom-call.2} parent=38 // loop_exit
          _
        // While loop
        $region47: #{custom-call.2} parent=38 // loop_pre_header
          _
        $region48: #{custom-call.2} parent=38 // loop_header
          %s294 = sphi %s268, %s302
          %s295 = sphi %s269, %s303
          %v296 = vphi %v270, %v296
          %p297 = scmp.gt.s32.totalorder %s294, %s266
        $region49: #{custom-call.2} parent=38 // loop_header_branch
          %299 = sbr.rel (%p297) target = $region53
        $region50: #{custom-call.2} parent=38 // loop_body
          %v300 = vld [vmem:[%s294] sm:$0xff]
          %301 = vst [vmem:[%s295] sm:$0xff] %v300
        $region51: #{custom-call.2} parent=38 // loop_footer
          %s302 = scalar_lea.vmem %s294, 8
          %s303 = scalar_lea.vmem %s295, 8
        $region52: #{custom-call.2} parent=38 // loop_footer_branch
          %304 = sbr.rel target = $region48
        $region53: #{custom-call.2} parent=38 // loop_exit
          _
      $region39: #{custom-call.2} parent=34 // pred_fallthru
        _
      %s305 = sand.u32 4, 7
      %s306 = sshllo.u32 0, %s305
      %s307 = smul.u32 %s258, 128
      %s308 = sshra.s32 %s307, 4
      %s309 = scalar_lea.vmem %s1, %s308
      %s310 = smul.u32 %s258, 128
      %s311 = sshra.s32 %s310, 4
      %s312 = scalar_lea.vmem [#allocation3], %s311
      %v313 = vld [vmem:[%s312] sm:%s306]
      %314 = vst [vmem:[%s309] sm:%s306] %v313
    $region35: #{custom-call.2} parent=1 // pred_fallthru
      _
    // Predicated region
    $region54: #{custom-call.2} parent=1 // pred_check
      _
    $region55: #{custom-call.2} parent=1 // pred_check_branch
      %316 = sbr.rel (0) target = $region57
    $region56: #{custom-call.2} parent=1 // pred_region
      %s318 = ssub.s32 16, 16
      %319 = vsyncadd [#allocation6], %s318
      %s320 = sshll.u32 [#allocation5], 4
      %s321 = int_to_ptr.vmem [resolvable:$true] %s320
      %323 = dma.vmem_to_hbm [thread:$0]  %s321, 16, %s2, [#allocation6]
    $region57: #{custom-call.2} parent=1 // pred_fallthru
      _
    // Predicated region
    $region58: #{custom-call.2} parent=1 // pred_check
      _
    $region59: #{custom-call.2} parent=1 // pred_check_branch
      %325 = sbr.rel (0) target = $region61
    $region60: #{custom-call.2} parent=1 // pred_region
      %s327 = ssub.s32 16, 16
      %328 = vsyncadd [#allocation9], %s327
      %s329 = sshll.u32 [#allocation8], 4
      %s330 = int_to_ptr.vmem [resolvable:$true] %s329
      %332 = dma.vmem_to_hbm [thread:$0]  %s330, 16, %s3, [#allocation9]
    $region61: #{custom-call.2} parent=1 // pred_fallthru
      _
    // Predicated region
    $region62: #{custom-call.2} parent=1 // pred_check
      _
    $region63: #{custom-call.2} parent=1 // pred_check_branch
      %334 = sbr.rel (0) target = $region65
    $region64: #{custom-call.2} parent=1 // pred_region
      %335 = dma.done [#allocation6], 16
    $region65: #{custom-call.2} parent=1 // pred_fallthru
      _
    // Predicated region
    $region66: #{custom-call.2} parent=1 // pred_check
      _
    $region67: #{custom-call.2} parent=1 // pred_check_branch
      %337 = sbr.rel (0) target = $region69
    $region68: #{custom-call.2} parent=1 // pred_region
      %338 = dma.done [#allocation9], 16
    $region69: #{custom-call.2} parent=1 // pred_fallthru
      _
    %339 = vsyncpa [#allocation6], 1
    %340 = vsyncpa [#allocation9], 1

// kernel: conv1x1_forward.1
$region0: #{conv1x1_forward.1}
  #allocation0 [shape = 'u32[]', space=smem, size = 0x4, offset = 0x4, fixed_abs, tag = 'smem constant byte address 0x4 - core index']
  #allocation1 [shape = 'u32[144,128]{1,0:T(1,128)}', space=vmem, size = 0x12000, scoped, tag = 'internal scratch']
  %s0 = inlined_call_operand.vmem [shape: f32[16], index: 0, kind: input, shape index: {}]
  %s1 = inlined_call_operand.vmem [shape: f32[4], index: 1, kind: input, shape index: {}]
  %s2 = inlined_call_operand.vmem [shape: f32[2,4,256], index: 2, kind: input, shape index: {}]
  %s3 = inlined_call_operand.vmem [shape: f32[2,4,256], index: 3, kind: output, shape index: {}]
  %s4 = sld [smem:[#allocation0]]
  $region53: #{conv1x1_forward.1} parent=0
    _
  %s6 = ssub.s32 1, %s4
  %s7 = scalar_select 0, %s6, %s4
  $region1: #{conv1x1_forward.1} parent=0
    #allocation2 [shape = 'u8[512]{0}', space=smem, size = 0x200, scoped, tag = 'input window, operand 0, single buffered']
    #allocation3 [shape = 's32[2]{0}', space=sflag, size = 0x8, scoped, tag = 'scoped memory for conv1x1_forward.1']
    #allocation4 [shape = 'u8[512]{0}', space=smem, size = 0x200, scoped, tag = 'input window, operand 1, single buffered']
    #allocation5 [shape = 's32[1]{0}', space=sflag, size = 0x4, scoped, tag = 'scoped memory for conv1x1_forward.1']
    %8 = vsyncpa [#allocation3], 0
    %9 = vsyncpa [#allocation5], 0
    loop: start=0, step=1, limit=4
    $region2: #{conv1x1_forward.1} parent=1 // loop_pre_header
      _
    $region3: #{conv1x1_forward.1} parent=1 // loop_header
      %s11 = sphi 0, %s15
      %p12 = scmp.ge.s32.totalorder %s11, 4
      %s18 = sphi 0, %s30
      %s19 = sphi 0, %s26
      %s20 = sphi 0, %s18
      %s21 = sphi 0, %s19
      %s22 = sphi 0, %s20
      %s23 = sphi 0, %s21
      %s31 = sphi 0, %s31
      %s33 = sphi 0, %s31
      %s34 = sphi 0, %s33
      %s48 = sphi 0, %s34
      %s52 = sphi 0, %s52
      %s54 = sphi 0, %s52
      %s55 = sphi 0, %s54
      %s69 = sphi 0, %s55
      %s77 = sphi 0, %s79
      %s80 = sphi 0, %s77
      %s81 = sphi 0, %s80
      %s97 = sphi 0, %s81
      %s105 = sphi 0, %s107
      %s108 = sphi 0, %s105
      %s109 = sphi 0, %s108
      %s125 = sphi 0, %s109
    $region4: #{conv1x1_forward.1} parent=1 // loop_header_branch
      %14 = sbr.rel (%p12) target = $region8
    $region5: #{conv1x1_forward.1} parent=1 // loop_body
      %s16 = ssub.s32 %s11, 1
      %s17 = ssub.s32 %s11, 2
      %s24 = sadd.s32 1, %s19
      %p25 = scmp.ge.s32.totalorder %s24, 1
      %s26 = scalar_select %p25, 0, %s24
      %s27 = sadd.s32 1, %s18
      %s28 = scalar_select %p25, %s27, %s18
      %p29 = scmp.ge.s32.totalorder %s28, 2
      %s30 = scalar_select %p29, 0, %s28
      %s32 = sadd.s32 %s31, 1
      %p35 = scmp.eq.s32.totalorder %s11, 1
      %p36 = scmp.ne.s32.totalorder %s31, %s33
      %p37 = scmp.eq.s32.totalorder %s11, 0
      %p38 = por %p36, %p37
      %p39 = scmp.ne.s32.totalorder %s31, %s33
      %p40 = scmp.eq.s32.totalorder %s16, 1
      %p41 = por %p39, %p40
      %p42 = scmp.ne.s32.totalorder %s33, %s34
      %p43 = scmp.eq.s32.totalorder %s16, 0
      %p44 = por %p42, %p43
      %p45 = scmp.ne.s32.totalorder %s33, %s34
      %p46 = scmp.eq.s32.totalorder %s17, 1
      %p47 = por %p45, %p46
      %p49 = scmp.ne.s32.totalorder %s34, %s48
      %p50 = scmp.eq.s32.totalorder %s17, 0
      %p51 = por %p49, %p50
      %s53 = sadd.s32 %s52, 1
      %p56 = scmp.eq.s32.totalorder %s11, 1
      %p57 = scmp.ne.s32.totalorder %s52, %s54
      %p58 = scmp.eq.s32.totalorder %s11, 0
      %p59 = por %p57, %p58
      %p60 = scmp.ne.s32.totalorder %s52, %s54
      %p61 = scmp.eq.s32.totalorder %s16, 1
      %p62 = por %p60, %p61
      %p63 = scmp.ne.s32.totalorder %s54, %s55
      %p64 = scmp.eq.s32.totalorder %s16, 0
      %p65 = por %p63, %p64
      %p66 = scmp.ne.s32.totalorder %s54, %s55
      %p67 = scmp.eq.s32.totalorder %s17, 1
      %p68 = por %p66, %p67
      %p70 = scmp.ne.s32.totalorder %s55, %s69
      %p71 = scmp.eq.s32.totalorder %s17, 0
      %p72 = por %p70, %p71
      %s73 = ssub.s32 %s18, %s30
      %s74 = ssub.s32 %s19, %s26
      %s75 = sor.u32 %s73, %s74
      %p76 = scmp.eq.s32.totalorder %s75, 0
      %s78 = sadd.s32 %s77, 1
      %s79 = scalar_select %p76, %s77, %s78
      %p82 = pneg %p76
      %p83 = scmp.eq.s32.totalorder %s11, 1
      %p84 = por %p82, %p83
      %p85 = scmp.ne.s32.totalorder %s77, %s80
      %p86 = scmp.eq.s32.totalorder %s11, 0
      %p87 = por %p85, %p86
      %p88 = scmp.ne.s32.totalorder %s77, %s80
      %p89 = scmp.eq.s32.totalorder %s16, 1
      %p90 = por %p88, %p89
      %p91 = scmp.ne.s32.totalorder %s80, %s81
      %p92 = scmp.eq.s32.totalorder %s16, 0
      %p93 = por %p91, %p92
      %p94 = scmp.ne.s32.totalorder %s80, %s81
      %p95 = scmp.eq.s32.totalorder %s17, 1
      %p96 = por %p94, %p95
      %p98 = scmp.ne.s32.totalorder %s81, %s97
      %p99 = scmp.eq.s32.totalorder %s17, 0
      %p100 = por %p98, %p99
      %s101 = ssub.s32 %s18, %s30
      %s102 = ssub.s32 %s19, %s26
      %s103 = sor.u32 %s101, %s102
      %p104 = scmp.eq.s32.totalorder %s103, 0
      %s106 = sadd.s32 %s105, 1
      %s107 = scalar_select %p104, %s105, %s106
      %p110 = pneg %p104
      %p111 = scmp.eq.s32.totalorder %s11, 1
      %p112 = por %p110, %p111
      %p113 = scmp.ne.s32.totalorder %s105, %s108
      %p114 = scmp.eq.s32.totalorder %s11, 0
      %p115 = por %p113, %p114
      %p116 = scmp.ne.s32.totalorder %s105, %s108
      %p117 = scmp.eq.s32.totalorder %s16, 1
      %p118 = por %p116, %p117
      %p119 = scmp.ne.s32.totalorder %s108, %s109
      %p120 = scmp.eq.s32.totalorder %s16, 0
      %p121 = por %p119, %p120
      %p122 = scmp.ne.s32.totalorder %s108, %s109
      %p123 = scmp.eq.s32.totalorder %s17, 1
      %p124 = por %p122, %p123
      %p126 = scmp.ne.s32.totalorder %s109, %s125
      %p127 = scmp.eq.s32.totalorder %s17, 0
      %p128 = por %p126, %p127
      %p129 = scmp.le.s32.totalorder 1, %s11
      %p130 = scmp.lt.s32.totalorder %s11, 3
      %p131 = pnand %p129, %p130
      %p132 = pneg %p131
      // Predicated region
      $region9: #{conv1x1_forward.1} parent=5 // pred_check
        _
      $region10: #{conv1x1_forward.1} parent=5 // pred_check_branch
        %134 = sbr.rel (%p131) target = $region12
      $region11: #{conv1x1_forward.1} parent=5 // pred_region
        %s135 = ssub.s32 %s11, 1
        // Predicated region
        $region13: #{conv1x1_forward.1} parent=11 // pred_check
          %p136 = pneg %p44
        $region14: #{conv1x1_forward.1} parent=11 // pred_check_branch
          %138 = sbr.rel (%p136) target = $region16
        $region15: #{conv1x1_forward.1} parent=11 // pred_region
          %s140 = ssub.s32 16, 16
          %141 = vsyncadd [#allocation3], %s140
          %s143 = sshll.u32 %s0, 4
          %s144 = int_to_ptr.vmem [resolvable:$true] %s143
          %146 = dma.vmem_to_smem %s144, 16, [#allocation2], [#allocation3]
        $region16: #{conv1x1_forward.1} parent=11 // pred_fallthru
          _
        // Predicated region
        $region17: #{conv1x1_forward.1} parent=11 // pred_check
          %p147 = pneg %p65
        $region18: #{conv1x1_forward.1} parent=11 // pred_check_branch
          %149 = sbr.rel (%p147) target = $region20
        $region19: #{conv1x1_forward.1} parent=11 // pred_region
          %s151 = ssub.s32 16, 16
          %152 = vsyncadd [#allocation5], %s151
          %s154 = sshll.u32 %s1, 4
          %s155 = int_to_ptr.vmem [resolvable:$true] %s154
          %157 = dma.vmem_to_smem %s155, 16, [#allocation4], [#allocation5]
        $region20: #{conv1x1_forward.1} parent=11 // pred_fallthru
          _
      $region12: #{conv1x1_forward.1} parent=5 // pred_fallthru
        _
      %p158 = scmp.lt.s32.totalorder %s11, 2
      // Predicated region
      $region21: #{conv1x1_forward.1} parent=5 // pred_check
        %p159 = pneg %p158
      $region22: #{conv1x1_forward.1} parent=5 // pred_check_branch
        %161 = sbr.rel (%p159) target = $region24
      $region23: #{conv1x1_forward.1} parent=5 // pred_region
        // Predicated region
        $region25: #{conv1x1_forward.1} parent=23 // pred_check
          %p162 = pneg %p87
        $region26: #{conv1x1_forward.1} parent=23 // pred_check_branch
          %164 = sbr.rel (%p162) target = $region28
        $region27: #{conv1x1_forward.1} parent=23 // pred_region
          %s165 = smul.u32 2, %s19
          %p166 = scmp.lt.s32.totalorder %s18, 1
          %s167 = scalar_select %p166, %s18, 1
          %p168 = scmp.lt.s32.totalorder %s165, 1
          %s169 = scalar_select %p168, %s165, 1
          %s170 = smul.addr %s167, 2
          %s171 = sadd.s32 %s169, %s170
          %s172 = smul.addr %s171, 4
          %s173 = scalar_lea.vmem %s2, %s172
          %s174 = smul.u32 2, %s19
        $region28: #{conv1x1_forward.1} parent=23 // pred_fallthru
          _
      $region24: #{conv1x1_forward.1} parent=5 // pred_fallthru
        _
      %p175 = scmp.le.s32.totalorder 1, %s11
      %p176 = scmp.lt.s32.totalorder %s11, 3
      %p177 = pnand %p175, %p176
      %p178 = pneg %p177
      // Predicated region
      $region29: #{conv1x1_forward.1} parent=5 // pred_check
        _
      $region30: #{conv1x1_forward.1} parent=5 // pred_check_branch
        %180 = sbr.rel (%p177) target = $region32
      $region31: #{conv1x1_forward.1} parent=5 // pred_region
        %s181 = ssub.s32 %s11, 1
        // Predicated region
        $region33: #{conv1x1_forward.1} parent=31 // pred_check
          %p182 = pneg %p44
        $region34: #{conv1x1_forward.1} parent=31 // pred_check_branch
          %184 = sbr.rel (%p182) target = $region36
        $region35: #{conv1x1_forward.1} parent=31 // pred_region
          %185 = dma.done [#allocation3], 16
        $region36: #{conv1x1_forward.1} parent=31 // pred_fallthru
          _
        // Predicated region
        $region37: #{conv1x1_forward.1} parent=31 // pred_check
          %p186 = pneg %p65
        $region38: #{conv1x1_forward.1} parent=31 // pred_check_branch
          %188 = sbr.rel (%p186) target = $region40
        $region39: #{conv1x1_forward.1} parent=31 // pred_region
          %189 = dma.done [#allocation5], 16
        $region40: #{conv1x1_forward.1} parent=31 // pred_fallthru
          _
        %190 = sfence
        %p191 = pneg %p44
        %p192 = pneg %p41
        %p193 = pneg %p65
        %p194 = pneg %p62
        %s195 = smul.u32 2, %s21
        %p196 = scmp.lt.s32.totalorder %s20, 1
        %s197 = scalar_select %p196, %s20, 1
        %p198 = scmp.lt.s32.totalorder %s195, 1
        %s199 = scalar_select %p198, %s195, 1
        %s200 = smul.addr %s197, 2
        %s201 = sadd.s32 %s199, %s200
        %s202 = smul.addr %s201, 4
        %s203 = scalar_lea.vmem %s2, %s202
        %p204 = pneg %p93
        %p205 = pneg %p90
        %p206 = pneg %p121
        %p207 = pneg %p118
        %s208 = smul.u32 2, %s21
        %p209 = scmp.lt.s32.totalorder %s20, 1
        %s210 = scalar_select %p209, %s20, 1
        %p211 = scmp.lt.s32.totalorder %s208, 1
        %s212 = scalar_select %p211, %s208, 1
        %s213 = smul.addr %s210, 2
        %s214 = sadd.s32 %s212, %s213
        %s215 = smul.addr %s214, 4
        %s216 = scalar_lea.vmem %s3, %s215
        %s217 = smul.u32 2, %s21
        %p218 = scmp.lt.s32.totalorder %s20, 1
        %s219 = scalar_select %p218, %s20, 1
        %p220 = scmp.lt.s32.totalorder %s217, 1
        %s221 = scalar_select %p220, %s217, 1
        %s222 = smul.addr %s219, 2
        %s223 = sadd.s32 %s221, %s222
        %s224 = smul.addr %s223, 4
        %s225 = scalar_lea.vmem %s2, %s224
        %s226 = smul.u32 2, %s21
        %s227 = smul.u32 2, %s21
        %p228 = scmp.lt.s32.totalorder %s20, 1
        %s229 = scalar_select %p228, %s20, 1
        %p230 = scmp.lt.s32.totalorder %s227, 1
        %s231 = scalar_select %p230, %s227, 1
        %s232 = smul.addr %s229, 2
        %s233 = sadd.s32 %s231, %s232
        %s234 = smul.addr %s233, 4
        %s235 = scalar_lea.vmem %s3, %s234
        %s236 = smul.u32 2, %s21
        %v237 = vld [vmem:[%s225] ss:$4 sm:$0x3]
        %s238 = scalar_lea.vmem %s225, 1
        %v239 = vld [vmem:[%s238] ss:$4 sm:$0x3]
        %s240 = scalar_lea.vmem %s225, 2
        %v241 = vld [vmem:[%s240] ss:$4 sm:$0x3]
        %s242 = scalar_lea.vmem %s225, 3
        %v243 = vld [vmem:[%s242] ss:$4 sm:$0x3]
        %s244 = sld [smem:[#allocation2]]
        %v245 = vstv %s244
        %v246 = vmul.f32 %v237, %v245
        %s247 = sld [smem:[#allocation2 + $0x1]]
        %v248 = vstv %s247
        %v249 = vmul.f32 %v239, %v248
        %v250 = vadd.f32 %v246, %v249
        %s251 = sld [smem:[#allocation2 + $0x2]]
        %v252 = vstv %s251
        %v253 = vmul.f32 %v241, %v252
        %v254 = vadd.f32 %v250, %v253
        %s255 = sld [smem:[#allocation2 + $0x3]]
        %v256 = vstv %s255
        %v257 = vmul.f32 %v243, %v256
        %v258 = vadd.f32 %v254, %v257
        %s259 = sld [smem:[#allocation4]]
        %v260 = vstv %s259
        %v261 = vadd.f32 %v258, %v260
        %v262 = vlaneseq
        %vm263 = vcmp.ge.s32.totalorder %v262, 0
        %vm264 = vcmp.lt.s32.totalorder %v262, 256
        %vm265 = vmand %vm263, %vm264
        %266 = vst.msk [vmem:[%s235] ss:$4 sm:$0x3] %vm265, %v261
        %s267 = sld [smem:[#allocation2 + $0x4]]
        %v268 = vstv %s267
        %v269 = vmul.f32 %v237, %v268
        %s270 = sld [smem:[#allocation2 + $0x5]]
        %v271 = vstv %s270
        %v272 = vmul.f32 %v239, %v271
        %v273 = vadd.f32 %v269, %v272
        %s274 = sld [smem:[#allocation2 + $0x6]]
        %v275 = vstv %s274
        %v276 = vmul.f32 %v241, %v275
        %v277 = vadd.f32 %v273, %v276
        %s278 = sld [smem:[#allocation2 + $0x7]]
        %v279 = vstv %s278
        %v280 = vmul.f32 %v243, %v279
        %v281 = vadd.f32 %v277, %v280
        %s282 = sld [smem:[#allocation4 + $0x1]]
        %v283 = vstv %s282
        %v284 = vadd.f32 %v281, %v283
        %s285 = scalar_lea.vmem %s235, 1
        %286 = vst.msk [vmem:[%s285] ss:$4 sm:$0x3] %vm265, %v284
        %s287 = sld [smem:[#allocation2 + $0x8]]
        %v288 = vstv %s287
        %v289 = vmul.f32 %v237, %v288
        %s290 = sld [smem:[#allocation2 + $0x9]]
        %v291 = vstv %s290
        %v292 = vmul.f32 %v239, %v291
        %v293 = vadd.f32 %v289, %v292
        %s294 = sld [smem:[#allocation2 + $0xa]]
        %v295 = vstv %s294
        %v296 = vmul.f32 %v241, %v295
        %v297 = vadd.f32 %v293, %v296
        %s298 = sld [smem:[#allocation2 + $0xb]]
        %v299 = vstv %s298
        %v300 = vmul.f32 %v243, %v299
        %v301 = vadd.f32 %v297, %v300
        %s302 = sld [smem:[#allocation4 + $0x2]]
        %v303 = vstv %s302
        %v304 = vadd.f32 %v301, %v303
        %s305 = scalar_lea.vmem %s235, 2
        %306 = vst.msk [vmem:[%s305] ss:$4 sm:$0x3] %vm265, %v304
        %s307 = sld [smem:[#allocation2 + $0xc]]
        %v308 = vstv %s307
        %v309 = vmul.f32 %v237, %v308
        %s310 = sld [smem:[#allocation2 + $0xd]]
        %v311 = vstv %s310
        %v312 = vmul.f32 %v239, %v311
        %v313 = vadd.f32 %v309, %v312
        %s314 = sld [smem:[#allocation2 + $0xe]]
        %v315 = vstv %s314
        %v316 = vmul.f32 %v241, %v315
        %v317 = vadd.f32 %v313, %v316
        %s318 = sld [smem:[#allocation2 + $0xf]]
        %v319 = vstv %s318
        %v320 = vmul.f32 %v243, %v319
        %v321 = vadd.f32 %v317, %v320
        %s322 = sld [smem:[#allocation4 + $0x3]]
        %v323 = vstv %s322
        %v324 = vadd.f32 %v321, %v323
        %s325 = scalar_lea.vmem %s235, 3
        %326 = vst.msk [vmem:[%s325] ss:$4 sm:$0x3] %vm265, %v324
        %s327 = smul.u32 2, %s21
        %p328 = scmp.lt.s32.totalorder %s20, 1
        %s329 = scalar_select %p328, %s20, 1
        %p330 = scmp.lt.s32.totalorder %s327, 1
        %s331 = scalar_select %p330, %s327, 1
        %s332 = smul.addr %s329, 2
        %s333 = sadd.s32 %s331, %s332
        %s334 = smul.addr %s333, 4
        %s335 = scalar_lea.vmem %s3, %s334
        // Predicated region
        $region41: #{conv1x1_forward.1} parent=31 // pred_check
          %p336 = pneg %p118
        $region42: #{conv1x1_forward.1} parent=31 // pred_check_branch
          %338 = sbr.rel (%p336) target = $region44
        $region43: #{conv1x1_forward.1} parent=31 // pred_region
          %s339 = smul.u32 2, %s21
        $region44: #{conv1x1_forward.1} parent=31 // pred_fallthru
          _
      $region32: #{conv1x1_forward.1} parent=5 // pred_fallthru
        _
      %p340 = scmp.le.s32.totalorder 2, %s11
      // Predicated region
      $region45: #{conv1x1_forward.1} parent=5 // pred_check
        %p341 = pneg %p340
      $region46: #{conv1x1_forward.1} parent=5 // pred_check_branch
        %343 = sbr.rel (%p341) target = $region48
      $region47: #{conv1x1_forward.1} parent=5 // pred_region
        %s344 = ssub.s32 %s11, 2
        // Predicated region
        $region49: #{conv1x1_forward.1} parent=47 // pred_check
          %p345 = pneg %p124
        $region50: #{conv1x1_forward.1} parent=47 // pred_check_branch
          %347 = sbr.rel (%p345) target = $region52
        $region51: #{conv1x1_forward.1} parent=47 // pred_region
          %s348 = smul.u32 2, %s23
          %p349 = scmp.lt.s32.totalorder %s22, 1
          %s350 = scalar_select %p349, %s22, 1
          %p351 = scmp.lt.s32.totalorder %s348, 1
          %s352 = scalar_select %p351, %s348, 1
          %s353 = smul.addr %s350, 2
          %s354 = sadd.s32 %s352, %s353
          %s355 = smul.addr %s354, 4
          %s356 = scalar_lea.vmem %s3, %s355
        $region52: #{conv1x1_forward.1} parent=47 // pred_fallthru
          _
      $region48: #{conv1x1_forward.1} parent=5 // pred_fallthru
        _
    $region6: #{conv1x1_forward.1} parent=1 // loop_footer
      %s15 = sadd.s32 1, %s11
    $region7: #{conv1x1_forward.1} parent=1 // loop_footer_branch
      %10 = sbr.rel target = $region3
    $region8: #{conv1x1_forward.1} parent=1 // loop_exit
      _
    %357 = vsyncpa [#allocation3], 1
    %s358 = scalar_lea.sflag [#allocation3], 1
    %359 = vsyncpa %s358, 1
    %360 = vsyncpa [#allocation5], 1

</llo_original>
